<compile_context>
chip_gen: v6e
topology: v6e:2x2x1
jax: 0.10.0
libtpu: 0.0.40
codegen_flags: <defaults>
</compile_context>

<pallas_src>
import jax
import jax.numpy as jnp
from jax.experimental import pallas as pl
from jax.experimental.pallas import tpu as pltpu


def _trim_kernel(x_ref, o_ref):
    # x_ref / o_ref are (C_BLK, h_out, w_out) VMEM slabs; straight copy.
    o_ref[...] = x_ref[...]


def trim(x, *, target_block_bytes=2 << 20):
    """Equivalent of Trim.forward: x[:, :, :128, :128] (NCHW)."""
    n, c, h, w = x.shape
    h_out = min(h, 128)
    w_out = min(w, 128)
    nc = n * c

    # Collapse N and C so many channels move per grid step (fewer, bigger DMAs).
    x2 = x.reshape(nc, h, w)

    itemsize = jnp.dtype(x.dtype).itemsize
    tile_bytes = h_out * w_out * itemsize

    # Block enough channels per step to hit ~2 MiB of output per step.
    c_blk = int(max(1, min(nc, target_block_bytes // tile_bytes)))

    # Prefer >= 8 grid steps (megacore sharding / pipelining) as long as each
    # step still moves >= 512 KiB.
    min_step_bytes = 512 << 10
    while c_blk > 1 and pl.cdiv(nc, c_blk) < 8 and (c_blk // 2) * tile_bytes >= min_step_bytes:
        c_blk //= 2

    grid = (pl.cdiv(nc, c_blk),)

    # Block last-two dims are either 128 (divisible by 8/128) or equal to the
    # full array dims, so the (8,128) BlockSpec constraint is always satisfied.
    in_spec = pl.BlockSpec((c_blk, h_out, w_out), lambda i: (i, 0, 0))
    out_spec = pl.BlockSpec((c_blk, h_out, w_out), lambda i: (i, 0, 0))

    cost = pl.CostEstimate(
        flops=0,
        transcendentals=0,
        bytes_accessed=2 * nc * h_out * w_out * itemsize,  # read + write
    )

    # Double-buffered (in + out) slabs: 4 * c_blk * tile_bytes. Cap the scoped
    # VMEM request at 32 MiB (safe on v5e/v6e/v7x), floor at 16 MiB.
    vmem_needed = 4 * c_blk * tile_bytes
    vmem_limit = int(min(max(2 * vmem_needed, 16 << 20), 32 << 20))

    y2 = pl.pallas_call(
        _trim_kernel,
        out_shape=jax.ShapeDtypeStruct((nc, h_out, w_out), x.dtype),
        grid=grid,
        in_specs=[in_spec],
        out_specs=out_spec,
        compiler_params=pltpu.CompilerParams(
            dimension_semantics=("parallel",),
            vmem_limit_bytes=vmem_limit,
        ),
        cost_estimate=cost,
    )(x2)

    return y2.reshape(n, c, h_out, w_out)


if __name__ == "__main__":
    key = jax.random.PRNGKey(0)
    # Spatial dims > 128 so the trim is non-trivial (output 128x128).
    x = jax.random.normal(key, (2, 3, 144, 160), dtype=jnp.float32)

    y = trim(x)
    y = jax.block_until_ready(y)

    expected = x[:, :, :128, :128]
    assert y.shape == (2, 3, 128, 128), y.shape
    assert y.dtype == x.dtype
    assert bool(jnp.array_equal(y, expected))

    print("KERNEL_OK")
</pallas_src>

<mosaic_0001>
module attributes {stable_mosaic.version = 11 : i64} {
  func.func @_trim_kernel(%arg0: i32, %arg1: memref<6x128x128xf32, #tpu.memory_space<vmem>>, %arg2: memref<6x128x128xf32, #tpu.memory_space<vmem>>) attributes {dimension_semantics = [#tpu.dimension_semantics<parallel>], iteration_bounds = array<i64: 1>, scalar_prefetch = 0 : i64, scratch_operands = 0 : i64, tpu.core_type = #tpu.core_type<tc>, window_params = [{transform_indices = @transform_0, window_bounds = array<i64: 6, 128, 128>}, {transform_indices = @transform_1, window_bounds = array<i64: 6, 128, 128>}]} {
    %c0 = arith.constant 0 : index
    %c0_0 = arith.constant 0 : index
    %c0_1 = arith.constant 0 : index
    %0 = vector.load %arg1[%c0, %c0_0, %c0_1] : memref<6x128x128xf32, #tpu.memory_space<vmem>>, vector<6x128x128xf32>
    %c0_2 = arith.constant 0 : index
    %c0_3 = arith.constant 0 : index
    %c0_4 = arith.constant 0 : index
    %1 = vector.load %arg2[%c0_2, %c0_3, %c0_4] : memref<6x128x128xf32, #tpu.memory_space<vmem>>, vector<6x128x128xf32>
    tpu.vector_store %arg2[%c0_2, %c0_3, %c0_4], %0 {strides = array<i32>} : memref<6x128x128xf32, #tpu.memory_space<vmem>>, vector<6x128x128xf32>,
    return
  }
  func.func @transform_0(%arg0: i32) -> (i32, i32, i32) {
    %c0_i32 = arith.constant 0 : i32
    %c0_i32_0 = arith.constant 0 : i32
    %c0_i32_1 = arith.constant 0 : i32
    return %arg0, %c0_i32, %c0_i32_0 : i32, i32, i32
  }
  func.func @transform_1(%arg0: i32) -> (i32, i32, i32) {
    %c0_i32 = arith.constant 0 : i32
    %c0_i32_0 = arith.constant 0 : i32
    %c0_i32_1 = arith.constant 0 : i32
    return %arg0, %c0_i32, %c0_i32_0 : i32, i32, i32
  }
}

</mosaic_0001>

<llo_original>
// kernel: tpu_custom_call.1
$region0: #{tpu_custom_call.1}
  #allocation0 [shape = 'u32[]', space=smem, size = 0x4, offset = 0x4, fixed_abs, tag = 'smem constant byte address 0x4 - core index']
  #allocation1 [shape = 'u32[144,128]{1,0:T(1,128)}', space=vmem, size = 0x12000, scoped, tag = 'internal scratch']
  #allocation6 [shape = 's32[]', space=sflag, size = 0x4, offset = 0, fixed_abs, tag = 'sflag constant byte address 0x0 - dummy sync flag']
  %s0 = inlined_call_operand.hbm [shape: f32[6,144,160], index: 0, kind: input, shape index: {}]
  %s1 = inlined_call_operand.hbm [shape: f32[6,128,128], index: 1, kind: output, shape index: {}]
  %s2 = sld [smem:[#allocation0]]
  $region18: #{tpu_custom_call.1} parent=0
    _
  %s4 = ssub.s32 1, %s2
  %s5 = scalar_select 0, %s4, %s2
  $region1: #{tpu_custom_call.1} parent=0
    #allocation2 [shape = 'u8[393216]{0}', space=vmem, size = 0x60000, scoped, tag = 'input window, operand 0, single buffered']
    #allocation3 [shape = 's32[1]{0}', space=sflag, size = 0x4, scoped, tag = 'scoped memory for tpu_custom_call.1']
    #allocation4 [shape = 's32[1]{0}', space=sflag, size = 0x4, scoped, tag = 'scoped memory for tpu_custom_call.1']
    #allocation5 [shape = 'u8[393216]{0}', space=vmem, size = 0x60000, scoped, tag = 'output window, operand 0, single buffered']
    %6 = vsyncpa [#allocation3], 0
    %7 = vsyncpa [#allocation4], 0
    // Predicated region
    $region2: #{tpu_custom_call.1} parent=1 // pred_check
      _
    $region3: #{tpu_custom_call.1} parent=1 // pred_check_branch
      %9 = sbr.rel (0) target = $region5
    $region4: #{tpu_custom_call.1} parent=1 // pred_region
      #allocation7 [shape = 'u32[6]{0}', space=smem, size = 0x18, scoped, tag = 'DMA stride descriptor']
      %s11 = ssub.s32 12288, 12288
      %12 = vsyncadd [#allocation3], %s11
      %s14 = sshll.u32 1, 14
      %s15 = sxor.u32 4294967295, %s14
      %s17 = sld [smem:[#allocation0]]
      %s18 = sadd.s32 2, %s17
      %s20 = sshll.u32 7, 26
      %s21 = sxor.u32 4294967295, %s20
      %s22 = sand.u32 0, %s21
      %s23 = sshll.u32 %s18, 26
      %s24 = sor.u32 %s22, %s23
      %s25 = sshll.u32 [#allocation2], 4
      %s26 = int_to_ptr.vmem [resolvable:$true] %s25
      %32 = sst [smem:[#allocation7]] 4608
      %s33 = scalar_lea.smem [#allocation7], 1
      %34 = sst [smem:[%s33]] 2048
      %s35 = scalar_lea.smem [#allocation7], 2
      %36 = sst [smem:[%s35]] 16
      %s37 = scalar_lea.smem [#allocation7], 3
      %38 = sst [smem:[%s37]] 256
      %s39 = scalar_lea.smem [#allocation7], 4
      %40 = sst [smem:[%s39]] 128
      %s41 = scalar_lea.smem [#allocation7], 5
      %42 = sst [smem:[%s41]] 8
      %44 = dma.general %s0, 12288, %s26, [#allocation3], 131072, [#allocation7], %s24, 0
    $region5: #{tpu_custom_call.1} parent=1 // pred_fallthru
      _
    // Predicated region
    $region6: #{tpu_custom_call.1} parent=1 // pred_check
      _
    $region7: #{tpu_custom_call.1} parent=1 // pred_check_branch
      %46 = sbr.rel (0) target = $region9
    $region8: #{tpu_custom_call.1} parent=1 // pred_region
      %47 = dma.done [#allocation3], 12288
    $region9: #{tpu_custom_call.1} parent=1 // pred_fallthru
      _
    %v48 = vld [vmem:[#allocation2] sm:$0xff]
    %v49 = vld [vmem:[#allocation2 + $0x8] sm:$0xff]
    %v50 = vld [vmem:[#allocation2 + $0x10] sm:$0xff]
    %v51 = vld [vmem:[#allocation2 + $0x18] sm:$0xff]
    %v52 = vld [vmem:[#allocation2 + $0x20] sm:$0xff]
    %v53 = vld [vmem:[#allocation2 + $0x28] sm:$0xff]
    %v54 = vld [vmem:[#allocation2 + $0x30] sm:$0xff]
    %v55 = vld [vmem:[#allocation2 + $0x38] sm:$0xff]
    %v56 = vld [vmem:[#allocation2 + $0x40] sm:$0xff]
    %v57 = vld [vmem:[#allocation2 + $0x48] sm:$0xff]
    %v58 = vld [vmem:[#allocation2 + $0x50] sm:$0xff]
    %v59 = vld [vmem:[#allocation2 + $0x58] sm:$0xff]
    %v60 = vld [vmem:[#allocation2 + $0x60] sm:$0xff]
    %v61 = vld [vmem:[#allocation2 + $0x68] sm:$0xff]
    %v62 = vld [vmem:[#allocation2 + $0x70] sm:$0xff]
    %v63 = vld [vmem:[#allocation2 + $0x78] sm:$0xff]
    %v64 = vld [vmem:[#allocation2 + $0x80] sm:$0xff]
    %v65 = vld [vmem:[#allocation2 + $0x88] sm:$0xff]
    %v66 = vld [vmem:[#allocation2 + $0x90] sm:$0xff]
    %v67 = vld [vmem:[#allocation2 + $0x98] sm:$0xff]
    %v68 = vld [vmem:[#allocation2 + $0xa0] sm:$0xff]
    %v69 = vld [vmem:[#allocation2 + $0xa8] sm:$0xff]
    %v70 = vld [vmem:[#allocation2 + $0xb0] sm:$0xff]
    %v71 = vld [vmem:[#allocation2 + $0xb8] sm:$0xff]
    %v72 = vld [vmem:[#allocation2 + $0xc0] sm:$0xff]
    %v73 = vld [vmem:[#allocation2 + $0xc8] sm:$0xff]
    %v74 = vld [vmem:[#allocation2 + $0xd0] sm:$0xff]
    %v75 = vld [vmem:[#allocation2 + $0xd8] sm:$0xff]
    %v76 = vld [vmem:[#allocation2 + $0xe0] sm:$0xff]
    %v77 = vld [vmem:[#allocation2 + $0xe8] sm:$0xff]
    %v78 = vld [vmem:[#allocation2 + $0xf0] sm:$0xff]
    %v79 = vld [vmem:[#allocation2 + $0xf8] sm:$0xff]
    %v80 = vld [vmem:[#allocation2 + $0x100] sm:$0xff]
    %v81 = vld [vmem:[#allocation2 + $0x108] sm:$0xff]
    %v82 = vld [vmem:[#allocation2 + $0x110] sm:$0xff]
    %v83 = vld [vmem:[#allocation2 + $0x118] sm:$0xff]
    %v84 = vld [vmem:[#allocation2 + $0x120] sm:$0xff]
    %v85 = vld [vmem:[#allocation2 + $0x128] sm:$0xff]
    %v86 = vld [vmem:[#allocation2 + $0x130] sm:$0xff]
    %v87 = vld [vmem:[#allocation2 + $0x138] sm:$0xff]
    %v88 = vld [vmem:[#allocation2 + $0x140] sm:$0xff]
    %v89 = vld [vmem:[#allocation2 + $0x148] sm:$0xff]
    %v90 = vld [vmem:[#allocation2 + $0x150] sm:$0xff]
    %v91 = vld [vmem:[#allocation2 + $0x158] sm:$0xff]
    %v92 = vld [vmem:[#allocation2 + $0x160] sm:$0xff]
    %v93 = vld [vmem:[#allocation2 + $0x168] sm:$0xff]
    %v94 = vld [vmem:[#allocation2 + $0x170] sm:$0xff]
    %v95 = vld [vmem:[#allocation2 + $0x178] sm:$0xff]
    %v96 = vld [vmem:[#allocation2 + $0x180] sm:$0xff]
    %v97 = vld [vmem:[#allocation2 + $0x188] sm:$0xff]
    %v98 = vld [vmem:[#allocation2 + $0x190] sm:$0xff]
    %v99 = vld [vmem:[#allocation2 + $0x198] sm:$0xff]
    %v100 = vld [vmem:[#allocation2 + $0x1a0] sm:$0xff]
    %v101 = vld [vmem:[#allocation2 + $0x1a8] sm:$0xff]
    %v102 = vld [vmem:[#allocation2 + $0x1b0] sm:$0xff]
    %v103 = vld [vmem:[#allocation2 + $0x1b8] sm:$0xff]
    %v104 = vld [vmem:[#allocation2 + $0x1c0] sm:$0xff]
    %v105 = vld [vmem:[#allocation2 + $0x1c8] sm:$0xff]
    %v106 = vld [vmem:[#allocation2 + $0x1d0] sm:$0xff]
    %v107 = vld [vmem:[#allocation2 + $0x1d8] sm:$0xff]
    %v108 = vld [vmem:[#allocation2 + $0x1e0] sm:$0xff]
    %v109 = vld [vmem:[#allocation2 + $0x1e8] sm:$0xff]
    %v110 = vld [vmem:[#allocation2 + $0x1f0] sm:$0xff]
    %v111 = vld [vmem:[#allocation2 + $0x1f8] sm:$0xff]
    %v112 = vld [vmem:[#allocation2 + $0x200] sm:$0xff]
    %v113 = vld [vmem:[#allocation2 + $0x208] sm:$0xff]
    %v114 = vld [vmem:[#allocation2 + $0x210] sm:$0xff]
    %v115 = vld [vmem:[#allocation2 + $0x218] sm:$0xff]
    %v116 = vld [vmem:[#allocation2 + $0x220] sm:$0xff]
    %v117 = vld [vmem:[#allocation2 + $0x228] sm:$0xff]
    %v118 = vld [vmem:[#allocation2 + $0x230] sm:$0xff]
    %v119 = vld [vmem:[#allocation2 + $0x238] sm:$0xff]
    %v120 = vld [vmem:[#allocation2 + $0x240] sm:$0xff]
    %v121 = vld [vmem:[#allocation2 + $0x248] sm:$0xff]
    %v122 = vld [vmem:[#allocation2 + $0x250] sm:$0xff]
    %v123 = vld [vmem:[#allocation2 + $0x258] sm:$0xff]
    %v124 = vld [vmem:[#allocation2 + $0x260] sm:$0xff]
    %v125 = vld [vmem:[#allocation2 + $0x268] sm:$0xff]
    %v126 = vld [vmem:[#allocation2 + $0x270] sm:$0xff]
    %v127 = vld [vmem:[#allocation2 + $0x278] sm:$0xff]
    %v128 = vld [vmem:[#allocation2 + $0x280] sm:$0xff]
    %v129 = vld [vmem:[#allocation2 + $0x288] sm:$0xff]
    %v130 = vld [vmem:[#allocation2 + $0x290] sm:$0xff]
    %v131 = vld [vmem:[#allocation2 + $0x298] sm:$0xff]
    %v132 = vld [vmem:[#allocation2 + $0x2a0] sm:$0xff]
    %v133 = vld [vmem:[#allocation2 + $0x2a8] sm:$0xff]
    %v134 = vld [vmem:[#allocation2 + $0x2b0] sm:$0xff]
    %v135 = vld [vmem:[#allocation2 + $0x2b8] sm:$0xff]
    %v136 = vld [vmem:[#allocation2 + $0x2c0] sm:$0xff]
    %v137 = vld [vmem:[#allocation2 + $0x2c8] sm:$0xff]
    %v138 = vld [vmem:[#allocation2 + $0x2d0] sm:$0xff]
    %v139 = vld [vmem:[#allocation2 + $0x2d8] sm:$0xff]
    %v140 = vld [vmem:[#allocation2 + $0x2e0] sm:$0xff]
    %v141 = vld [vmem:[#allocation2 + $0x2e8] sm:$0xff]
    %v142 = vld [vmem:[#allocation2 + $0x2f0] sm:$0xff]
    %v143 = vld [vmem:[#allocation2 + $0x2f8] sm:$0xff]
    %144 = vst [vmem:[#allocation5] sm:$0xff] %v48
    %145 = vst [vmem:[#allocation5 + $0x8] sm:$0xff] %v49
    %146 = vst [vmem:[#allocation5 + $0x10] sm:$0xff] %v50
    %147 = vst [vmem:[#allocation5 + $0x18] sm:$0xff] %v51
    %148 = vst [vmem:[#allocation5 + $0x20] sm:$0xff] %v52
    %149 = vst [vmem:[#allocation5 + $0x28] sm:$0xff] %v53
    %150 = vst [vmem:[#allocation5 + $0x30] sm:$0xff] %v54
    %151 = vst [vmem:[#allocation5 + $0x38] sm:$0xff] %v55
    %152 = vst [vmem:[#allocation5 + $0x40] sm:$0xff] %v56
    %153 = vst [vmem:[#allocation5 + $0x48] sm:$0xff] %v57
    %154 = vst [vmem:[#allocation5 + $0x50] sm:$0xff] %v58
    %155 = vst [vmem:[#allocation5 + $0x58] sm:$0xff] %v59
    %156 = vst [vmem:[#allocation5 + $0x60] sm:$0xff] %v60
    %157 = vst [vmem:[#allocation5 + $0x68] sm:$0xff] %v61
    %158 = vst [vmem:[#allocation5 + $0x70] sm:$0xff] %v62
    %159 = vst [vmem:[#allocation5 + $0x78] sm:$0xff] %v63
    %160 = vst [vmem:[#allocation5 + $0x80] sm:$0xff] %v64
    %161 = vst [vmem:[#allocation5 + $0x88] sm:$0xff] %v65
    %162 = vst [vmem:[#allocation5 + $0x90] sm:$0xff] %v66
    %163 = vst [vmem:[#allocation5 + $0x98] sm:$0xff] %v67
    %164 = vst [vmem:[#allocation5 + $0xa0] sm:$0xff] %v68
    %165 = vst [vmem:[#allocation5 + $0xa8] sm:$0xff] %v69
    %166 = vst [vmem:[#allocation5 + $0xb0] sm:$0xff] %v70
    %167 = vst [vmem:[#allocation5 + $0xb8] sm:$0xff] %v71
    %168 = vst [vmem:[#allocation5 + $0xc0] sm:$0xff] %v72
    %169 = vst [vmem:[#allocation5 + $0xc8] sm:$0xff] %v73
    %170 = vst [vmem:[#allocation5 + $0xd0] sm:$0xff] %v74
    %171 = vst [vmem:[#allocation5 + $0xd8] sm:$0xff] %v75
    %172 = vst [vmem:[#allocation5 + $0xe0] sm:$0xff] %v76
    %173 = vst [vmem:[#allocation5 + $0xe8] sm:$0xff] %v77
    %174 = vst [vmem:[#allocation5 + $0xf0] sm:$0xff] %v78
    %175 = vst [vmem:[#allocation5 + $0xf8] sm:$0xff] %v79
    %176 = vst [vmem:[#allocation5 + $0x100] sm:$0xff] %v80
    %177 = vst [vmem:[#allocation5 + $0x108] sm:$0xff] %v81
    %178 = vst [vmem:[#allocation5 + $0x110] sm:$0xff] %v82
    %179 = vst [vmem:[#allocation5 + $0x118] sm:$0xff] %v83
    %180 = vst [vmem:[#allocation5 + $0x120] sm:$0xff] %v84
    %181 = vst [vmem:[#allocation5 + $0x128] sm:$0xff] %v85
    %182 = vst [vmem:[#allocation5 + $0x130] sm:$0xff] %v86
    %183 = vst [vmem:[#allocation5 + $0x138] sm:$0xff] %v87
    %184 = vst [vmem:[#allocation5 + $0x140] sm:$0xff] %v88
    %185 = vst [vmem:[#allocation5 + $0x148] sm:$0xff] %v89
    %186 = vst [vmem:[#allocation5 + $0x150] sm:$0xff] %v90
    %187 = vst [vmem:[#allocation5 + $0x158] sm:$0xff] %v91
    %188 = vst [vmem:[#allocation5 + $0x160] sm:$0xff] %v92
    %189 = vst [vmem:[#allocation5 + $0x168] sm:$0xff] %v93
    %190 = vst [vmem:[#allocation5 + $0x170] sm:$0xff] %v94
    %191 = vst [vmem:[#allocation5 + $0x178] sm:$0xff] %v95
    %192 = vst [vmem:[#allocation5 + $0x180] sm:$0xff] %v96
    %193 = vst [vmem:[#allocation5 + $0x188] sm:$0xff] %v97
    %194 = vst [vmem:[#allocation5 + $0x190] sm:$0xff] %v98
    %195 = vst [vmem:[#allocation5 + $0x198] sm:$0xff] %v99
    %196 = vst [vmem:[#allocation5 + $0x1a0] sm:$0xff] %v100
    %197 = vst [vmem:[#allocation5 + $0x1a8] sm:$0xff] %v101
    %198 = vst [vmem:[#allocation5 + $0x1b0] sm:$0xff] %v102
    %199 = vst [vmem:[#allocation5 + $0x1b8] sm:$0xff] %v103
    %200 = vst [vmem:[#allocation5 + $0x1c0] sm:$0xff] %v104
    %201 = vst [vmem:[#allocation5 + $0x1c8] sm:$0xff] %v105
    %202 = vst [vmem:[#allocation5 + $0x1d0] sm:$0xff] %v106
    %203 = vst [vmem:[#allocation5 + $0x1d8] sm:$0xff] %v107
    %204 = vst [vmem:[#allocation5 + $0x1e0] sm:$0xff] %v108
    %205 = vst [vmem:[#allocation5 + $0x1e8] sm:$0xff] %v109
    %206 = vst [vmem:[#allocation5 + $0x1f0] sm:$0xff] %v110
    %207 = vst [vmem:[#allocation5 + $0x1f8] sm:$0xff] %v111
    %208 = vst [vmem:[#allocation5 + $0x200] sm:$0xff] %v112
    %209 = vst [vmem:[#allocation5 + $0x208] sm:$0xff] %v113
    %210 = vst [vmem:[#allocation5 + $0x210] sm:$0xff] %v114
    %211 = vst [vmem:[#allocation5 + $0x218] sm:$0xff] %v115
    %212 = vst [vmem:[#allocation5 + $0x220] sm:$0xff] %v116
    %213 = vst [vmem:[#allocation5 + $0x228] sm:$0xff] %v117
    %214 = vst [vmem:[#allocation5 + $0x230] sm:$0xff] %v118
    %215 = vst [vmem:[#allocation5 + $0x238] sm:$0xff] %v119
    %216 = vst [vmem:[#allocation5 + $0x240] sm:$0xff] %v120
    %217 = vst [vmem:[#allocation5 + $0x248] sm:$0xff] %v121
    %218 = vst [vmem:[#allocation5 + $0x250] sm:$0xff] %v122
    %219 = vst [vmem:[#allocation5 + $0x258] sm:$0xff] %v123
    %220 = vst [vmem:[#allocation5 + $0x260] sm:$0xff] %v124
    %221 = vst [vmem:[#allocation5 + $0x268] sm:$0xff] %v125
    %222 = vst [vmem:[#allocation5 + $0x270] sm:$0xff] %v126
    %223 = vst [vmem:[#allocation5 + $0x278] sm:$0xff] %v127
    %224 = vst [vmem:[#allocation5 + $0x280] sm:$0xff] %v128
    %225 = vst [vmem:[#allocation5 + $0x288] sm:$0xff] %v129
    %226 = vst [vmem:[#allocation5 + $0x290] sm:$0xff] %v130
    %227 = vst [vmem:[#allocation5 + $0x298] sm:$0xff] %v131
    %228 = vst [vmem:[#allocation5 + $0x2a0] sm:$0xff] %v132
    %229 = vst [vmem:[#allocation5 + $0x2a8] sm:$0xff] %v133
    %230 = vst [vmem:[#allocation5 + $0x2b0] sm:$0xff] %v134
    %231 = vst [vmem:[#allocation5 + $0x2b8] sm:$0xff] %v135
    %232 = vst [vmem:[#allocation5 + $0x2c0] sm:$0xff] %v136
    %233 = vst [vmem:[#allocation5 + $0x2c8] sm:$0xff] %v137
    %234 = vst [vmem:[#allocation5 + $0x2d0] sm:$0xff] %v138
    %235 = vst [vmem:[#allocation5 + $0x2d8] sm:$0xff] %v139
    %236 = vst [vmem:[#allocation5 + $0x2e0] sm:$0xff] %v140
    %237 = vst [vmem:[#allocation5 + $0x2e8] sm:$0xff] %v141
    %238 = vst [vmem:[#allocation5 + $0x2f0] sm:$0xff] %v142
    %239 = vst [vmem:[#allocation5 + $0x2f8] sm:$0xff] %v143
    // Predicated region
    $region10: #{tpu_custom_call.1} parent=1 // pred_check
      _
    $region11: #{tpu_custom_call.1} parent=1 // pred_check_branch
      %241 = sbr.rel (0) target = $region13
    $region12: #{tpu_custom_call.1} parent=1 // pred_region
      %s243 = ssub.s32 12288, 12288
      %244 = vsyncadd [#allocation4], %s243
      %s245 = sshll.u32 [#allocation5], 4
      %s246 = int_to_ptr.vmem [resolvable:$true] %s245
      %251 = dma.vmem_to_hbm [thread:$0]  %s246, 12288, %s1, [#allocation4], 128, 128, 8
    $region13: #{tpu_custom_call.1} parent=1 // pred_fallthru
      _
    // Predicated region
    $region14: #{tpu_custom_call.1} parent=1 // pred_check
      _
    $region15: #{tpu_custom_call.1} parent=1 // pred_check_branch
      %253 = sbr.rel (0) target = $region17
    $region16: #{tpu_custom_call.1} parent=1 // pred_region
      %254 = dma.done [#allocation4], 12288
    $region17: #{tpu_custom_call.1} parent=1 // pred_fallthru
      _
    %255 = vsyncpa [#allocation3], 1
    %256 = vsyncpa [#allocation4], 1

</llo_original>
